<compile_context>
chip_gen: v6e
topology: v6e:2x2x1
jax: 0.10.0
libtpu: 0.0.40
codegen_flags: <defaults>
</compile_context>

<pallas_src>
import jax
import jax.numpy as jnp
from jax.experimental import pallas as pl
from jax.experimental.pallas import tpu as pltpu


def _round_up(x, m):
    return (x + m - 1) // m * m


_VMEM_INFO_CACHE = {}


def _vmem_limit_and_tile_n():
    """Generation-aware VMEM limit / default N tile (v5e/v6e: 128 MiB phys,
    v7x: 64 MiB phys)."""
    if "v" not in _VMEM_INFO_CACHE:
        try:
            cap = int(pltpu.get_tpu_info().vmem_capacity_bytes)
        except Exception:
            cap = 64 * 1024 * 1024                       # conservative (v7x) fallback
        limit = min(96 * 1024 * 1024, (cap * 3) // 4)    # 96 MiB on 128-MiB chips, 48 MiB on v7x
        tile_n = 2048 if cap >= 100 * 1024 * 1024 else 1024
        _VMEM_INFO_CACHE["v"] = (limit, tile_n)
    return _VMEM_INFO_CACHE["v"]


# ----------------------------------------------------------------------------
# Pallas kernels
# ----------------------------------------------------------------------------
def _dual_mlp_mean_kernel(x_ref, w1c, b1c,
                          vw2, vb2, vw3, vb3,
                          tw2, tb2, tw3, tb3,
                          ov_ref, ot_ref):
    # Both weighting MLPs (Linear -> ReLU -> Linear -> ReLU -> Linear) fused
    # with the batch-mean reduction.  The two first layers share x, so their
    # weights are concatenated into one [D, 2H] MXU matmul.  Matmuls run
    # bf16 x bf16 -> f32; elementwise ops stay f32 (v5e has no bf16 VPU).
    # Dropout from the reference MLP is eval-mode identity.
    x = x_ref[...]                                           # [B, D] bf16
    H = vw2.shape[0]

    h = jnp.dot(x, w1c[...], preferred_element_type=jnp.float32) + b1c[...]
    h = jnp.maximum(h, 0.0).astype(jnp.bfloat16)             # [B, 2H]
    hv, ht = h[:, :H], h[:, H:]

    def tail(hh, w2, b2, w3, b3):
        hh = jnp.dot(hh, w2[...], preferred_element_type=jnp.float32) + b2[...]
        hh = jnp.maximum(hh, 0.0).astype(jnp.bfloat16)
        return jnp.dot(hh, w3[...], preferred_element_type=jnp.float32) + b3[...]

    ov_ref[...] = jnp.mean(tail(hv, vw2, vb2, vw3, vb3), axis=0, keepdims=True)
    ot_ref[...] = jnp.mean(tail(ht, tw2, tb2, tw3, tb3), axis=0, keepdims=True)


def dual_mlp_mean(x_bf16, visual_mlp, textual_mlp):
    # TODO(synk): for large batches, grid over B (multiple of 16, "parallel")
    # and accumulate the batch mean across grid steps.
    vw1, vb1, vw2, vb2, vw3, vb3 = visual_mlp
    tw1, tb1, tw2, tb2, tw3, tb3 = textual_mlp
    w1c = jnp.concatenate([vw1, tw1], axis=1).astype(jnp.bfloat16)   # [D, 2H]
    b1c = jnp.concatenate([vb1, tb1], axis=1)                        # [1, 2H] f32

    args = (x_bf16, w1c, b1c,
            vw2.astype(jnp.bfloat16), vb2, vw3.astype(jnp.bfloat16), vb3,
            tw2.astype(jnp.bfloat16), tb2, tw3.astype(jnp.bfloat16), tb3)
    L = vb3.shape[-1]
    vmem = pl.BlockSpec(memory_space=pltpu.MemorySpace.VMEM)
    return pl.pallas_call(
        _dual_mlp_mean_kernel,
        out_shape=(jax.ShapeDtypeStruct((1, L), jnp.float32),
                   jax.ShapeDtypeStruct((1, L), jnp.float32)),
        in_specs=[vmem] * len(args),
        out_specs=(pl.BlockSpec(memory_space=pltpu.MemorySpace.VMEM),
                   pl.BlockSpec(memory_space=pltpu.MemorySpace.VMEM)),
    )(*args)


def _prescale_projection(proj, weight):
    # Fold the per-layer scalar weight into the [L, C, D] projection ONCE per
    # forward (f32 multiply, then bf16 cast) — hoisted out of the Pallas hot
    # loop per the perf review.  Tiny fused XLA op (L*C*D elements).
    return (weight[0][:, None, None] * proj.astype(jnp.float32)).astype(jnp.bfloat16)


def _layer_proj_kernel(feat_ref, proj_ref, o_ref):
    # out[n, d] = sum_l (features[l] @ (w_l * projection[l]))[n, d]
    # grid = (N tiles "parallel", D tiles "parallel", L "arbitrary" innermost);
    # the output block index is constant across l, so we accumulate straight
    # into o_ref (do NOT flip the L axis to "parallel").
    l = pl.program_id(2)

    @pl.when(l == 0)
    def _():
        o_ref[...] = jnp.zeros_like(o_ref)

    # feat_ref block: [1, TN, C] bf16; proj_ref block: [L, C, TD] bf16,
    # VMEM-resident (constant index map) and already weight-scaled.
    o_ref[...] += jnp.dot(feat_ref[0], proj_ref[l],
                          preferred_element_type=jnp.float32)


def weighted_layer_proj(features, proj_scaled, *, tile_n=None, tile_d=None):
    """einsum('abc,acd->abd') with the layer weight pre-folded into the proj,
    summed over layers.  N-tiled (and optionally D-tiled).

    features:     [L, N, C] bf16
    proj_scaled:  [L, C, D] bf16 (per-layer weight already folded in)
    returns       [N, D]    f32
    """
    L, N, C = features.shape
    D = proj_scaled.shape[-1]
    vmem_limit, default_tn = _vmem_limit_and_tile_n()
    if tile_n is None:
        tile_n = default_tn

    # bf16 rows pack 16 sublanes per vreg: align rows to 16 (not 8), never to TN.
    N16 = _round_up(N, 16)
    if N16 != N:
        features = jnp.pad(features, ((0, 0), (0, N16 - N), (0, 0)))
    TN = min(tile_n, N16)

    if tile_d is None or tile_d >= D or D % tile_d != 0 or tile_d % 128 != 0:
        TD = D
    else:
        TD = tile_d

    out = pl.pallas_call(
        _layer_proj_kernel,
        out_shape=jax.ShapeDtypeStruct((N16, D), jnp.float32),
        grid=(pl.cdiv(N16, TN), pl.cdiv(D, TD), L),
        in_specs=[
            pl.BlockSpec((1, TN, C), lambda n, d, l: (l, n, 0)),
            # Full [L, C, TD] projection block, constant index over n/l:
            # DMA'd once, stays VMEM-resident (~9.4 MiB bf16 at CLIP scale).
            pl.BlockSpec((L, C, TD), lambda n, d, l: (0, 0, d)),
        ],
        out_specs=pl.BlockSpec((TN, TD), lambda n, d, l: (n, d)),
        compiler_params=pltpu.CompilerParams(
            dimension_semantics=("parallel", "parallel", "arbitrary"),
            vmem_limit_bytes=vmem_limit,
        ),
    )(features, proj_scaled)
    return out if N == N16 else out[:N]


def _logits_kernel(scale_ref, img_ref, txt_t_ref, o_ref):
    # txt_t_ref is already L2-normalized, bf16, and transposed to [D, NCp]
    # (lane-dense, padded to a multiple of 128) outside the kernel, so the
    # matmul is a plain [B, D] x [D, NCp] MXU op with no in-kernel relayout.
    img = img_ref[...]                                       # [B, D] f32
    img = img * jax.lax.rsqrt(jnp.sum(img * img, axis=-1, keepdims=True) + 1e-12)
    sim = jnp.dot(img.astype(jnp.bfloat16), txt_t_ref[...],
                  preferred_element_type=jnp.float32)
    o_ref[...] = jnp.exp(scale_ref[0]) * sim


def clip_logits(image_features, text_features, logit_scale):
    # TODO(synk): for production n_cls, tile over (B, NC) blocks.
    B, D = image_features.shape
    NC = text_features.shape[0]
    # Normalize + cast + transpose text features once, outside the kernel.
    txt = text_features * jax.lax.rsqrt(
        jnp.sum(text_features * text_features, axis=-1, keepdims=True) + 1e-12)
    txt_t = txt.astype(jnp.bfloat16).T                       # [D, NC]
    NCp = _round_up(NC, 128)                                 # lane-dense output
    if NCp != NC:
        txt_t = jnp.pad(txt_t, ((0, 0), (0, NCp - NC)))

    out = pl.pallas_call(
        _logits_kernel,
        out_shape=jax.ShapeDtypeStruct((B, NCp), jnp.float32),
        in_specs=[
            pl.BlockSpec(memory_space=pltpu.MemorySpace.SMEM),
            pl.BlockSpec(memory_space=pltpu.MemorySpace.VMEM),
            pl.BlockSpec(memory_space=pltpu.MemorySpace.VMEM),
        ],
        out_specs=pl.BlockSpec(memory_space=pltpu.MemorySpace.VMEM),
    )(logit_scale, image_features, txt_t)
    return out[:, :NC]


# ----------------------------------------------------------------------------
# Frozen CLIP-style backbone (plain JAX glue, deterministic synthetic weights)
# ----------------------------------------------------------------------------
def layer_norm(x, g, b, eps=1e-5):
    mu = jnp.mean(x, axis=-1, keepdims=True)
    var = jnp.mean((x - mu) ** 2, axis=-1, keepdims=True)
    return (x - mu) / jnp.sqrt(var + eps) * g + b


def resblock(x, p):
    # x: [S, B, W] seq-first; pre-LN single-head attention + MLP residual block.
    W = x.shape[-1]
    h = layer_norm(x, p["ln1_g"], p["ln1_b"])
    q, k, v = h @ p["wq"], h @ p["wk"], h @ p["wv"]
    qb, kb, vb = (jnp.transpose(t, (1, 0, 2)) for t in (q, k, v))
    s = jnp.einsum("bqd,bkd->bqk", qb, kb) / jnp.sqrt(jnp.float32(W))
    a = jax.nn.softmax(s, axis=-1)
    o = jnp.einsum("bqk,bkd->bqd", a, vb)
    x = x + jnp.transpose(o, (1, 0, 2)) @ p["wo"]
    h2 = layer_norm(x, p["ln2_g"], p["ln2_b"])
    x = x + jax.nn.gelu(h2 @ p["w_fc"]) @ p["w_proj"]
    return x


def image_encoder_features(image, V):
    # Mirrors ImageEncoder.forward: conv1 patch-embed, CLS, pos-emb, ln_pre,
    # per-layer CLS collection, ln_post.  -> [L, B, visual_width]
    B, Cin, H, W = image.shape
    p = V["patch"]
    Hg, Wg = H // p, W // p
    # Conv2d(kernel=stride=p, bias=False) == patch extraction + matmul.
    patches = jnp.transpose(
        image.reshape(B, Cin, Hg, p, Wg, p), (0, 2, 4, 1, 3, 5)
    ).reshape(B, Hg * Wg, Cin * p * p)
    x = patches @ V["conv_w"]                                   # [B, np, Wv]
    cls = jnp.broadcast_to(V["class_embedding"], (B, 1, x.shape[-1]))
    x = jnp.concatenate([cls, x], axis=1)
    x = x + V["pos_embedding"]
    x = layer_norm(x, V["ln_pre_g"], V["ln_pre_b"])
    x = jnp.transpose(x, (1, 0, 2))                             # [S, B, Wv]
    out_list = []
    for blk in V["blocks"]:
        x = resblock(x, blk)
        out_list.append(jnp.transpose(x, (1, 0, 2))[:, 0, :])   # CLS per layer
    feats = jnp.stack(out_list)                                 # [L, B, Wv]
    return layer_norm(feats, V["ln_post_g"], V["ln_post_b"])


def text_encoder_features(prompt_embeddings, T):
    # Mirrors TextEncoder.forward. prompt_embeddings: [Ntmpl, St, Wt]
    x = prompt_embeddings + T["pos_embedding"]
    x = jnp.transpose(x, (1, 0, 2))                             # [St, Ntmpl, Wt]
    out_list = []
    for blk in T["blocks"]:
        x = resblock(x, blk)
        out_list.append(jnp.transpose(x, (1, 0, 2)))
    feats = jnp.stack(out_list)                                 # [L, Ntmpl, St, Wt]
    return layer_norm(feats, T["ln_final_g"], T["ln_final_b"])


# ----------------------------------------------------------------------------
# CustomCLIP.forward
# ----------------------------------------------------------------------------
def custom_clip_forward(image, P):
    # Frozen visual backbone runs ONCE: clip_model.encode_image is exactly
    # feats[-1] @ visual.proj of the same per-layer CLS stack used below.
    feats = image_encoder_features(image, P["visual"])                  # [L, B, Wv]
    clip_image_feature = feats[-1] @ P["visual"]["image_projection"]    # [B, EMB]

    mean_image_weight, mean_text_weight = dual_mlp_mean(
        clip_image_feature.astype(jnp.bfloat16),
        P["visual_mlp"], P["textual_mlp"])                              # [1, L] x2
    # (custom_image_weight / custom_text_weight in the reference are unused)

    D = P["visual_projection"].shape[-1]
    # Image branch has only one N tile (N=B); split D so v7x's second
    # TensorCore gets work.  (No-op at small D.)
    img_tile_d = (D // 2) if (D % 256 == 0) else None

    # image branch: ImageEncoder.forward + ImageEncoder.proj
    image_features = weighted_layer_proj(
        feats.astype(jnp.bfloat16),
        _prescale_projection(P["visual_projection"], mean_image_weight),
        tile_d=img_tile_d)                                              # [B, D]

    # text branch: _proj_base_text_features.  The EOT gather and the
    # mean-over-templates were hoisted to init time (frozen data; projection
    # and layer weighting are linear, so the mean commutes) — forward just
    # projects the precomputed [L, NC, Wt] slab.
    n_cls = len(P["base_text_features"])
    text_features = weighted_layer_proj(
        P["text_feats_eot"],
        _prescale_projection(P["textual_projection"], mean_text_weight),
    )[:n_cls]                                                           # [NC, D]

    return clip_logits(image_features, text_features, P["logit_scale"])


# Pure-JAX mirror of the original op order (gather -> project -> mean), same
# bf16 operand casts / f32 accumulation: correctness oracle for the kernels.
def custom_clip_forward_ref(image, P):
    feats = image_encoder_features(image, P["visual"])
    cif = (feats[-1] @ P["visual"]["image_projection"]).astype(jnp.bfloat16)

    def mlp_ref(x, prm):
        w1, b1, w2, b2, w3, b3 = prm
        h = jnp.dot(x, w1.astype(jnp.bfloat16), preferred_element_type=jnp.float32) + b1
        h = jnp.maximum(h, 0.0).astype(jnp.bfloat16)
        h = jnp.dot(h, w2.astype(jnp.bfloat16), preferred_element_type=jnp.float32) + b2
        h = jnp.maximum(h, 0.0).astype(jnp.bfloat16)
        return jnp.dot(h, w3.astype(jnp.bfloat16), preferred_element_type=jnp.float32) + b3

    miw = jnp.mean(mlp_ref(cif, P["visual_mlp"]), axis=0, keepdims=True)
    mtw = jnp.mean(mlp_ref(cif, P["textual_mlp"]), axis=0, keepdims=True)

    def proj_ref(f, pr, w):
        f = f.astype(jnp.bfloat16)
        wp = (w[0][:, None, None] * pr.astype(jnp.float32)).astype(jnp.bfloat16)
        per = jnp.einsum("lnc,lcd->lnd", f, wp, preferred_element_type=jnp.float32)
        return jnp.sum(per, axis=0)

    imf = proj_ref(feats, P["visual_projection"], miw)
    sel = [f[:, jnp.arange(f.shape[1]), e, :]
           for f, e in zip(P["base_text_features"], P["token_eot"])]
    n_cls, T = len(sel), sel[0].shape[1]
    txt = proj_ref(jnp.concatenate(sel, axis=1), P["textual_projection"], mtw)
    txt = txt.reshape(n_cls, T, -1).mean(axis=1)

    imf = imf * jax.lax.rsqrt(jnp.sum(imf * imf, axis=-1, keepdims=True) + 1e-12)
    txt = txt * jax.lax.rsqrt(jnp.sum(txt * txt, axis=-1, keepdims=True) + 1e-12)
    sim = jnp.dot(imf.astype(jnp.bfloat16), txt.astype(jnp.bfloat16).T,
                  preferred_element_type=jnp.float32)
    return jnp.exp(P["logit_scale"][0]) * sim


# ----------------------------------------------------------------------------
# Deterministic parameter construction (small shapes)
# ----------------------------------------------------------------------------
def init_params(key, *, B, Cin, H, patch, Wv, Wt, D, L, St, n_cls, n_tmpl,
                vocab, mlp_hidden):
    keys = iter(jax.random.split(key, 256))

    def nrm(shape, scale=0.02):
        return scale * jax.random.normal(next(keys), shape, dtype=jnp.float32)

    def make_blocks(width):
        blocks = []
        for _ in range(L):
            s = width ** -0.5
            blocks.append(dict(
                ln1_g=jnp.ones((width,), jnp.float32),
                ln1_b=jnp.zeros((width,), jnp.float32),
                wq=nrm((width, width), s), wk=nrm((width, width), s),
                wv=nrm((width, width), s), wo=nrm((width, width), s),
                ln2_g=jnp.ones((width,), jnp.float32),
                ln2_b=jnp.zeros((width,), jnp.float32),
                w_fc=nrm((width, 2 * width), s),
                w_proj=nrm((2 * width, width), (2 * width) ** -0.5),
            ))
        return blocks

    S = (H // patch) ** 2 + 1
    image_projection = (Wv ** -0.5) * jax.random.normal(next(keys), (Wv, D), jnp.float32)
    visual = dict(
        patch=patch,
        conv_w=nrm((Cin * patch * patch, Wv), (Cin * patch * patch) ** -0.5),
        class_embedding=nrm((Wv,), Wv ** -0.5),
        pos_embedding=nrm((S, Wv), 0.01),
        ln_pre_g=jnp.ones((Wv,), jnp.float32), ln_pre_b=jnp.zeros((Wv,), jnp.float32),
        ln_post_g=jnp.ones((Wv,), jnp.float32), ln_post_b=jnp.zeros((Wv,), jnp.float32),
        blocks=make_blocks(Wv),
        image_projection=image_projection,
    )
    # visual_projection: L-1 fresh (visual_scale * randn) + clip visual.proj last
    visual_projection = jnp.stack(
        [(Wv ** -0.5) * jax.random.normal(next(keys), (Wv, D), jnp.float32)
         for _ in range(L - 1)] + [image_projection])

    text_projection = (Wt ** -0.5) * jax.random.normal(next(keys), (Wt, D), jnp.float32)
    textual = dict(
        pos_embedding=nrm((St, Wt), 0.01),
        ln_final_g=jnp.ones((Wt,), jnp.float32),
        ln_final_b=jnp.zeros((Wt,), jnp.float32),
        blocks=make_blocks(Wt),
    )
    textual_projection = jnp.stack(
        [(Wt ** -0.5) * jax.random.normal(next(keys), (Wt, D), jnp.float32)
         for _ in range(L - 1)] + [text_projection])

    # frozen token embedding + per-class tokens / base text features
    token_embedding = nrm((vocab, Wt), 0.02)
    base_text_features, token_eot = [], []
    for c in range(n_cls):
        tokens = jax.random.randint(next(keys), (n_tmpl, St), 1, vocab - 2)
        eot_pos = St - 2 - (c % 3)
        tokens = tokens.at[:, eot_pos].set(vocab - 1)           # EOT = max token id
        token_eot.append(jnp.argmax(tokens, axis=-1))           # [n_tmpl]
        emb = token_embedding[tokens]                           # [n_tmpl, St, Wt]
        base_text_features.append(text_encoder_features(emb, textual))

    # Init-time precompute on FROZEN data: gather the EOT token per class and
    # template, then mean over templates.  Projection and per-layer weighting
    # are linear, so the forward output is mathematically identical to the
    # reference's gather -> project -> mean order.  Rows padded to a multiple
    # of 16 (bf16 sublane pack) so forward never pads / copies the slab.
    sel = jnp.stack(
        [bf[:, jnp.arange(bf.shape[1]), eot, :]
         for bf, eot in zip(base_text_features, token_eot)], axis=1)  # [L, NC, T, Wt]
    text_feats_eot = sel.mean(axis=2)                                 # [L, NC, Wt]
    NC16 = _round_up(n_cls, 16)
    if NC16 != n_cls:
        text_feats_eot = jnp.pad(text_feats_eot,
                                 ((0, 0), (0, NC16 - n_cls), (0, 0)))
    text_feats_eot = text_feats_eot.astype(jnp.bfloat16)

    def make_mlp(n_in, n_out):
        def xavier(fan_in, fan_out):
            lim = (6.0 / (fan_in + fan_out)) ** 0.5
            return jax.random.uniform(next(keys), (fan_in, fan_out),
                                      jnp.float32, -lim, lim)
        return (xavier(n_in, mlp_hidden), jnp.full((1, mlp_hidden), 0.01, jnp.float32),
                xavier(mlp_hidden, mlp_hidden), jnp.full((1, mlp_hidden), 0.01, jnp.float32),
                xavier(mlp_hidden, n_out), jnp.full((1, n_out), 0.01, jnp.float32))

    return dict(
        visual=visual,
        textual=textual,
        visual_projection=visual_projection,
        textual_projection=textual_projection,
        base_text_features=base_text_features,
        token_eot=token_eot,
        text_feats_eot=text_feats_eot,
        visual_mlp=make_mlp(D, L),        # EMBEDDING_DIM -> 12 (=L here)
        textual_mlp=make_mlp(D, L),
        logit_scale=jnp.array([jnp.log(1.0 / 0.07)], dtype=jnp.float32),
    )


if __name__ == "__main__":
    # Small shapes consistent with the module (reference: B x 3 x 224 x 224,
    # width 768, dim 512, 12 layers -> scaled down here).  D=256 so the
    # image-branch D-split (tile_d) code path is exercised.
    B, Cin, H = 2, 3, 16
    patch, Wv, Wt, D, L = 8, 32, 32, 256, 4
    St, n_cls, n_tmpl, vocab = 8, 3, 1, 64
    mlp_hidden = 32   # 512 in the reference MLP

    key = jax.random.PRNGKey(0)
    pkey, ikey = jax.random.split(key)
    params = init_params(pkey, B=B, Cin=Cin, H=H, patch=patch, Wv=Wv, Wt=Wt,
                         D=D, L=L, St=St, n_cls=n_cls, n_tmpl=n_tmpl,
                         vocab=vocab, mlp_hidden=mlp_hidden)
    image = jax.random.normal(ikey, (B, Cin, H, H), dtype=jnp.float32)

    logits = jax.block_until_ready(custom_clip_forward(image, params))
    ref = jax.block_until_ready(custom_clip_forward_ref(image, params))

    assert logits.shape == (B, n_cls), logits.shape
    assert jnp.all(jnp.isfinite(logits))
    # bf16 matmul operands with f32 accumulation in both paths; small slack for
    # accumulation-order / rsqrt lowering differences.
    assert jnp.allclose(logits, ref, atol=1e-2, rtol=1e-2), (logits, ref)
    print("KERNEL_OK")
</pallas_src>

<mosaic_0001>
module attributes {stable_mosaic.version = 11 : i64} {
  func.func @_dual_mlp_mean_kernel(%arg0: memref<2x256xbf16, #tpu.memory_space<vmem>>, %arg1: memref<256x64xbf16, #tpu.memory_space<vmem>>, %arg2: memref<1x64xf32, #tpu.memory_space<vmem>>, %arg3: memref<32x32xbf16, #tpu.memory_space<vmem>>, %arg4: memref<1x32xf32, #tpu.memory_space<vmem>>, %arg5: memref<32x4xbf16, #tpu.memory_space<vmem>>, %arg6: memref<1x4xf32, #tpu.memory_space<vmem>>, %arg7: memref<32x32xbf16, #tpu.memory_space<vmem>>, %arg8: memref<1x32xf32, #tpu.memory_space<vmem>>, %arg9: memref<32x4xbf16, #tpu.memory_space<vmem>>, %arg10: memref<1x4xf32, #tpu.memory_space<vmem>>, %arg11: memref<1x4xf32, #tpu.memory_space<vmem>>, %arg12: memref<1x4xf32, #tpu.memory_space<vmem>>) attributes {dimension_semantics = [], scalar_prefetch = 0 : i64, scratch_operands = 0 : i64, tpu.core_type = #tpu.core_type<tc>} {
    %c0 = arith.constant 0 : index
    %c0_0 = arith.constant 0 : index
    %0 = vector.load %arg0[%c0, %c0_0] : memref<2x256xbf16, #tpu.memory_space<vmem>>, vector<2x256xbf16>
    %c0_1 = arith.constant 0 : index
    %c0_2 = arith.constant 0 : index
    %1 = vector.load %arg1[%c0_1, %c0_2] : memref<256x64xbf16, #tpu.memory_space<vmem>>, vector<256x64xbf16>
    %cst = arith.constant dense<0.000000e+00> : vector<2x64xf32>
    %2 = tpu.matmul %0, %1, %cst {dimension_numbers = #tpu.dot_dimension_numbers<[1], [0], [0], [1], [0, 0, 1, 1], [], []>} : vector<2x256xbf16>, vector<256x64xbf16>, vector<2x64xf32> -> vector<2x64xf32>
    %c0_3 = arith.constant 0 : index
    %c0_4 = arith.constant 0 : index
    %3 = vector.load %arg2[%c0_3, %c0_4] : memref<1x64xf32, #tpu.memory_space<vmem>>, vector<1x64xf32>
    %4 = vector.broadcast %3 : vector<1x64xf32> to vector<2x64xf32>
    %5 = arith.addf %2, %4 : vector<2x64xf32>
    %cst_5 = arith.constant 0.000000e+00 : f32
    %6 = vector.broadcast %cst_5 : f32 to vector<2x64xf32>
    %7 = arith.maximumf %5, %6 : vector<2x64xf32>
    %8 = arith.truncf %7 : vector<2x64xf32> to vector<2x64xbf16>
    %9 = vector.extract_strided_slice %8 {offsets = [0, 0], sizes = [2, 32], strides = [1, 1]} : vector<2x64xbf16> to vector<2x32xbf16>
    %10 = vector.extract_strided_slice %8 {offsets = [0, 32], sizes = [2, 32], strides = [1, 1]} : vector<2x64xbf16> to vector<2x32xbf16>
    %c0_6 = arith.constant 0 : index
    %c0_7 = arith.constant 0 : index
    %11 = vector.load %arg3[%c0_6, %c0_7] : memref<32x32xbf16, #tpu.memory_space<vmem>>, vector<32x32xbf16>
    %cst_8 = arith.constant dense<0.000000e+00> : vector<2x32xf32>
    %12 = tpu.matmul %9, %11, %cst_8 {dimension_numbers = #tpu.dot_dimension_numbers<[1], [0], [0], [1], [0, 0, 1, 1], [], []>} : vector<2x32xbf16>, vector<32x32xbf16>, vector<2x32xf32> -> vector<2x32xf32>
    %c0_9 = arith.constant 0 : index
    %c0_10 = arith.constant 0 : index
    %13 = vector.load %arg4[%c0_9, %c0_10] : memref<1x32xf32, #tpu.memory_space<vmem>>, vector<1x32xf32>
    %14 = vector.broadcast %13 : vector<1x32xf32> to vector<2x32xf32>
    %15 = arith.addf %12, %14 : vector<2x32xf32>
    %cst_11 = arith.constant 0.000000e+00 : f32
    %16 = vector.broadcast %cst_11 : f32 to vector<2x32xf32>
    %17 = arith.maximumf %15, %16 : vector<2x32xf32>
    %18 = arith.truncf %17 : vector<2x32xf32> to vector<2x32xbf16>
    %c0_12 = arith.constant 0 : index
    %c0_13 = arith.constant 0 : index
    %19 = vector.load %arg5[%c0_12, %c0_13] : memref<32x4xbf16, #tpu.memory_space<vmem>>, vector<32x4xbf16>
    %cst_14 = arith.constant dense<0.000000e+00> : vector<2x4xf32>
    %20 = tpu.matmul %18, %19, %cst_14 {dimension_numbers = #tpu.dot_dimension_numbers<[1], [0], [0], [1], [0, 0, 1, 1], [], []>} : vector<2x32xbf16>, vector<32x4xbf16>, vector<2x4xf32> -> vector<2x4xf32>
    %c0_15 = arith.constant 0 : index
    %c0_16 = arith.constant 0 : index
    %21 = vector.load %arg6[%c0_15, %c0_16] : memref<1x4xf32, #tpu.memory_space<vmem>>, vector<1x4xf32>
    %22 = vector.broadcast %21 : vector<1x4xf32> to vector<2x4xf32>
    %23 = arith.addf %20, %22 : vector<2x4xf32>
    %cst_17 = arith.constant dense<0.000000e+00> : vector<4xf32>
    %24 = vector.multi_reduction <add>, %23, %cst_17 [0] : vector<2x4xf32> to vector<4xf32>
    %25 = vector.shape_cast %24 : vector<4xf32> to vector<1x4xf32>
    %cst_18 = arith.constant 2.000000e+00 : f32
    %26 = vector.broadcast %cst_18 : f32 to vector<1x4xf32>
    %27 = arith.divf %25, %26 : vector<1x4xf32>
    %c0_19 = arith.constant 0 : index
    %c0_20 = arith.constant 0 : index
    %28 = vector.load %arg11[%c0_19, %c0_20] : memref<1x4xf32, #tpu.memory_space<vmem>>, vector<1x4xf32>
    tpu.vector_store %arg11[%c0_19, %c0_20], %27 {strides = array<i32>} : memref<1x4xf32, #tpu.memory_space<vmem>>, vector<1x4xf32>,
    %c0_21 = arith.constant 0 : index
    %c0_22 = arith.constant 0 : index
    %29 = vector.load %arg7[%c0_21, %c0_22] : memref<32x32xbf16, #tpu.memory_space<vmem>>, vector<32x32xbf16>
    %cst_23 = arith.constant dense<0.000000e+00> : vector<2x32xf32>
    %30 = tpu.matmul %10, %29, %cst_23 {dimension_numbers = #tpu.dot_dimension_numbers<[1], [0], [0], [1], [0, 0, 1, 1], [], []>} : vector<2x32xbf16>, vector<32x32xbf16>, vector<2x32xf32> -> vector<2x32xf32>
    %c0_24 = arith.constant 0 : index
    %c0_25 = arith.constant 0 : index
    %31 = vector.load %arg8[%c0_24, %c0_25] : memref<1x32xf32, #tpu.memory_space<vmem>>, vector<1x32xf32>
    %32 = vector.broadcast %31 : vector<1x32xf32> to vector<2x32xf32>
    %33 = arith.addf %30, %32 : vector<2x32xf32>
    %cst_26 = arith.constant 0.000000e+00 : f32
    %34 = vector.broadcast %cst_26 : f32 to vector<2x32xf32>
    %35 = arith.maximumf %33, %34 : vector<2x32xf32>
    %36 = arith.truncf %35 : vector<2x32xf32> to vector<2x32xbf16>
    %c0_27 = arith.constant 0 : index
    %c0_28 = arith.constant 0 : index
    %37 = vector.load %arg9[%c0_27, %c0_28] : memref<32x4xbf16, #tpu.memory_space<vmem>>, vector<32x4xbf16>
    %cst_29 = arith.constant dense<0.000000e+00> : vector<2x4xf32>
    %38 = tpu.matmul %36, %37, %cst_29 {dimension_numbers = #tpu.dot_dimension_numbers<[1], [0], [0], [1], [0, 0, 1, 1], [], []>} : vector<2x32xbf16>, vector<32x4xbf16>, vector<2x4xf32> -> vector<2x4xf32>
    %c0_30 = arith.constant 0 : index
    %c0_31 = arith.constant 0 : index
    %39 = vector.load %arg10[%c0_30, %c0_31] : memref<1x4xf32, #tpu.memory_space<vmem>>, vector<1x4xf32>
    %40 = vector.broadcast %39 : vector<1x4xf32> to vector<2x4xf32>
    %41 = arith.addf %38, %40 : vector<2x4xf32>
    %cst_32 = arith.constant dense<0.000000e+00> : vector<4xf32>
    %42 = vector.multi_reduction <add>, %41, %cst_32 [0] : vector<2x4xf32> to vector<4xf32>
    %43 = vector.shape_cast %42 : vector<4xf32> to vector<1x4xf32>
    %cst_33 = arith.constant 2.000000e+00 : f32
    %44 = vector.broadcast %cst_33 : f32 to vector<1x4xf32>
    %45 = arith.divf %43, %44 : vector<1x4xf32>
    %c0_34 = arith.constant 0 : index
    %c0_35 = arith.constant 0 : index
    %46 = vector.load %arg12[%c0_34, %c0_35] : memref<1x4xf32, #tpu.memory_space<vmem>>, vector<1x4xf32>
    tpu.vector_store %arg12[%c0_34, %c0_35], %45 {strides = array<i32>} : memref<1x4xf32, #tpu.memory_space<vmem>>, vector<1x4xf32>,
    return
  }
}

</mosaic_0001>

<llo_original>
// kernel: tpu_custom_call.1
$region0: #{tpu_custom_call.1}
  #allocation0 [shape = 'u32[]', space=smem, size = 0x4, offset = 0x4, fixed_abs, tag = 'smem constant byte address 0x4 - core index']
  #allocation1 [shape = 'u32[144,128]{1,0:T(1,128)}', space=vmem, size = 0x12000, scoped, tag = 'internal scratch']
  %s0 = inlined_call_operand.vmem [shape: bf16[2,256], index: 0, kind: input, shape index: {}]
  %s1 = inlined_call_operand.vmem [shape: bf16[256,64], index: 1, kind: input, shape index: {}]
  %s2 = inlined_call_operand.vmem [shape: f32[1,64], index: 2, kind: input, shape index: {}]
  %s3 = inlined_call_operand.vmem [shape: bf16[32,32], index: 3, kind: input, shape index: {}]
  %s4 = inlined_call_operand.vmem [shape: f32[1,32], index: 4, kind: input, shape index: {}]
  %s5 = inlined_call_operand.vmem [shape: bf16[32,4], index: 5, kind: input, shape index: {}]
  %s6 = inlined_call_operand.vmem [shape: f32[1,4], index: 6, kind: input, shape index: {}]
  %s7 = inlined_call_operand.vmem [shape: bf16[32,32], index: 7, kind: input, shape index: {}]
  %s8 = inlined_call_operand.vmem [shape: f32[1,32], index: 8, kind: input, shape index: {}]
  %s9 = inlined_call_operand.vmem [shape: bf16[32,4], index: 9, kind: input, shape index: {}]
  %s10 = inlined_call_operand.vmem [shape: f32[1,4], index: 10, kind: input, shape index: {}]
  %s11 = inlined_call_operand.hbm [shape: f32[1,4], index: 11, kind: output, shape index: {0}]
  %s12 = inlined_call_operand.hbm [shape: f32[1,4], index: 12, kind: output, shape index: {1}]
  %13 = xla_tuple %s11, %s12
  %s14 = sld [smem:[#allocation0]]
  $region62: #{tpu_custom_call.1} parent=0
    _
  %s16 = ssub.s32 1, %s14
  %s17 = scalar_select 0, %s16, %s14
  $region1: #{tpu_custom_call.1} parent=0
    #allocation2 [shape = 'u8[512]{0}', space=vmem, size = 0x400, scoped, tag = 'output window, operand 0, single buffered']
    #allocation3 [shape = 's32[1]{0}', space=sflag, size = 0x4, scoped, tag = 'scoped memory for tpu_custom_call.1']
    #allocation4 [shape = 'u8[512]{0}', space=vmem, size = 0x400, scoped, tag = 'output window, operand 1, single buffered']
    #allocation5 [shape = 's32[1]{0}', space=sflag, size = 0x4, scoped, tag = 'scoped memory for tpu_custom_call.1']
    %18 = vsyncpa [#allocation3], 0
    %19 = vsyncpa [#allocation5], 0
    // Predicated region
    $region2: #{tpu_custom_call.1} parent=1 // pred_check
      _
    $region3: #{tpu_custom_call.1} parent=1 // pred_check_branch
      %21 = sbr.rel (0) target = $region5
    $region4: #{tpu_custom_call.1} parent=1 // pred_region
      _
    $region5: #{tpu_custom_call.1} parent=1 // pred_fallthru
      _
    // Predicated region
    $region6: #{tpu_custom_call.1} parent=1 // pred_check
      _
    $region7: #{tpu_custom_call.1} parent=1 // pred_check_branch
      %23 = sbr.rel (0) target = $region9
    $region8: #{tpu_custom_call.1} parent=1 // pred_region
      _
    $region9: #{tpu_custom_call.1} parent=1 // pred_fallthru
      _
    // Predicated region
    $region10: #{tpu_custom_call.1} parent=1 // pred_check
      _
    $region11: #{tpu_custom_call.1} parent=1 // pred_check_branch
      %25 = sbr.rel (0) target = $region13
    $region12: #{tpu_custom_call.1} parent=1 // pred_region
      _
    $region13: #{tpu_custom_call.1} parent=1 // pred_fallthru
      _
    // Predicated region
    $region14: #{tpu_custom_call.1} parent=1 // pred_check
      _
    $region15: #{tpu_custom_call.1} parent=1 // pred_check_branch
      %27 = sbr.rel (0) target = $region17
    $region16: #{tpu_custom_call.1} parent=1 // pred_region
      _
    $region17: #{tpu_custom_call.1} parent=1 // pred_fallthru
      _
    // Predicated region
    $region18: #{tpu_custom_call.1} parent=1 // pred_check
      _
    $region19: #{tpu_custom_call.1} parent=1 // pred_check_branch
      %29 = sbr.rel (0) target = $region21
    $region20: #{tpu_custom_call.1} parent=1 // pred_region
      _
    $region21: #{tpu_custom_call.1} parent=1 // pred_fallthru
      _
    // Predicated region
    $region22: #{tpu_custom_call.1} parent=1 // pred_check
      _
    $region23: #{tpu_custom_call.1} parent=1 // pred_check_branch
      %31 = sbr.rel (0) target = $region25
    $region24: #{tpu_custom_call.1} parent=1 // pred_region
      _
    $region25: #{tpu_custom_call.1} parent=1 // pred_fallthru
      _
    // Predicated region
    $region26: #{tpu_custom_call.1} parent=1 // pred_check
      _
    $region27: #{tpu_custom_call.1} parent=1 // pred_check_branch
      %33 = sbr.rel (0) target = $region29
    $region28: #{tpu_custom_call.1} parent=1 // pred_region
      _
    $region29: #{tpu_custom_call.1} parent=1 // pred_fallthru
      _
    // Predicated region
    $region30: #{tpu_custom_call.1} parent=1 // pred_check
      _
    $region31: #{tpu_custom_call.1} parent=1 // pred_check_branch
      %35 = sbr.rel (0) target = $region33
    $region32: #{tpu_custom_call.1} parent=1 // pred_region
      _
    $region33: #{tpu_custom_call.1} parent=1 // pred_fallthru
      _
    // Predicated region
    $region34: #{tpu_custom_call.1} parent=1 // pred_check
      _
    $region35: #{tpu_custom_call.1} parent=1 // pred_check_branch
      %37 = sbr.rel (0) target = $region37
    $region36: #{tpu_custom_call.1} parent=1 // pred_region
      _
    $region37: #{tpu_custom_call.1} parent=1 // pred_fallthru
      _
    // Predicated region
    $region38: #{tpu_custom_call.1} parent=1 // pred_check
      _
    $region39: #{tpu_custom_call.1} parent=1 // pred_check_branch
      %39 = sbr.rel (0) target = $region41
    $region40: #{tpu_custom_call.1} parent=1 // pred_region
      _
    $region41: #{tpu_custom_call.1} parent=1 // pred_fallthru
      _
    // Predicated region
    $region42: #{tpu_custom_call.1} parent=1 // pred_check
      _
    $region43: #{tpu_custom_call.1} parent=1 // pred_check_branch
      %41 = sbr.rel (0) target = $region45
    $region44: #{tpu_custom_call.1} parent=1 // pred_region
      _
    $region45: #{tpu_custom_call.1} parent=1 // pred_fallthru
      _
    %v43 = vld [vmem:[%s0] sm:$0x3]
    %v44 = vld [vmem:[%s1] sm:$0xf]
    %v45 = vld [vmem:[%s1 + $0x4] sm:$0xf]
    %v46 = vld [vmem:[%s1 + $0x8] sm:$0xf]
    %v47 = vld [vmem:[%s1 + $0xc] sm:$0xf]
    %v48 = vld [vmem:[%s1 + $0x10] sm:$0xf]
    %v49 = vld [vmem:[%s1 + $0x14] sm:$0xf]
    %v50 = vld [vmem:[%s1 + $0x18] sm:$0xf]
    %v51 = vld [vmem:[%s1 + $0x1c] sm:$0xf]
    %v52 = vld [vmem:[%s1 + $0x20] sm:$0xf]
    %v53 = vld [vmem:[%s1 + $0x24] sm:$0xf]
    %v54 = vld [vmem:[%s1 + $0x28] sm:$0xf]
    %v55 = vld [vmem:[%s1 + $0x2c] sm:$0xf]
    %v56 = vld [vmem:[%s1 + $0x30] sm:$0xf]
    %v57 = vld [vmem:[%s1 + $0x34] sm:$0xf]
    %v58 = vld [vmem:[%s1 + $0x38] sm:$0xf]
    %v59 = vld [vmem:[%s1 + $0x3c] sm:$0xf]
    %v60 = vld [vmem:[%s1 + $0x40] sm:$0xf]
    %v61 = vld [vmem:[%s1 + $0x44] sm:$0xf]
    %v62 = vld [vmem:[%s1 + $0x48] sm:$0xf]
    %v63 = vld [vmem:[%s1 + $0x4c] sm:$0xf]
    %v64 = vld [vmem:[%s1 + $0x50] sm:$0xf]
    %v65 = vld [vmem:[%s1 + $0x54] sm:$0xf]
    %v66 = vld [vmem:[%s1 + $0x58] sm:$0xf]
    %v67 = vld [vmem:[%s1 + $0x5c] sm:$0xf]
    %v68 = vld [vmem:[%s1 + $0x60] sm:$0xf]
    %v69 = vld [vmem:[%s1 + $0x64] sm:$0xf]
    %v70 = vld [vmem:[%s1 + $0x68] sm:$0xf]
    %v71 = vld [vmem:[%s1 + $0x6c] sm:$0xf]
    %v72 = vld [vmem:[%s1 + $0x70] sm:$0xf]
    %v73 = vld [vmem:[%s1 + $0x74] sm:$0xf]
    %v74 = vld [vmem:[%s1 + $0x78] sm:$0xf]
    %v75 = vld [vmem:[%s1 + $0x7c] sm:$0xf]
    %v76 = vld [vmem:[%s2] sm:$0x1]
    %v78 = vlaneseq
    %v79 = vshrl.u32 %v78, 7
    %v80 = vsub.s32 0, %v79
    %v81 = vrot.slane %v76, %v80
    %v85 = vunpack.c.l.s4 1966171168
    %v86 = vunpack.c.0.s8 %v85
    %v87 = vlaneseq
    %v88 = vshrl.u32 %v87, 7
    %v89 = vsub.s32 %v86, %v88
    %v90 = vrot.slane %v43, %v89
    %v91 = vcombine.high %v90, %v90
    %v93 = vunpack.c.l.s4 1966171168
    %v94 = vunpack.c.0.s8 %v93
    %v95 = vlaneseq
    %v96 = vshrl.u32 %v95, 7
    %v97 = vsub.s32 %v94, %v96
    %v98 = vrot.slane %v90, %v97
    %v100 = vunpack.c.l.s4 1966171168
    %v101 = vunpack.c.0.s8 %v100
    %v102 = vlaneseq
    %v103 = vshrl.u32 %v102, 7
    %v104 = vsub.s32 %v101, %v103
    %v105 = vrot.slane %v91, %v104
    %v140 = vunpack.c.l.b16 %v44
    %v141 = vunpack.c.l.b16 %v45
    %v142 = vunpack.c.l.b16 %v46
    %v143 = vunpack.c.l.b16 %v47
    %v144 = vunpack.c.l.b16 %v48
    %v145 = vunpack.c.l.b16 %v49
    %v146 = vunpack.c.l.b16 %v50
    %v147 = vunpack.c.l.b16 %v51
    %v148 = vunpack.c.l.b16 %v52
    %v149 = vunpack.c.l.b16 %v53
    %v150 = vunpack.c.l.b16 %v54
    %v151 = vunpack.c.l.b16 %v55
    %v152 = vunpack.c.l.b16 %v56
    %v153 = vunpack.c.l.b16 %v57
    %v154 = vunpack.c.l.b16 %v58
    %v155 = vunpack.c.l.b16 %v59
    %v156 = vunpack.c.l.b16 %v60
    %v157 = vunpack.c.l.b16 %v61
    %v158 = vunpack.c.l.b16 %v62
    %v159 = vunpack.c.l.b16 %v63
    %v160 = vunpack.c.l.b16 %v64
    %v161 = vunpack.c.l.b16 %v65
    %v162 = vunpack.c.l.b16 %v66
    %v163 = vunpack.c.l.b16 %v67
    %v164 = vunpack.c.l.b16 %v68
    %v165 = vunpack.c.l.b16 %v69
    %v166 = vunpack.c.l.b16 %v70
    %v167 = vunpack.c.l.b16 %v71
    %v168 = vunpack.c.l.b16 %v72
    %v169 = vunpack.c.l.b16 %v73
    %v170 = vunpack.c.l.b16 %v74
    %v171 = vunpack.c.l.b16 %v75
    %v172 = vpack.c.b16 %v141, %v140
    %v173 = vpack.c.b16 %v143, %v142
    %v174 = vpack.c.b16 %v145, %v144
    %v175 = vpack.c.b16 %v147, %v146
    %v176 = vpack.c.b16 %v149, %v148
    %v177 = vpack.c.b16 %v151, %v150
    %v178 = vpack.c.b16 %v153, %v152
    %v179 = vpack.c.b16 %v155, %v154
    %v180 = vpack.c.b16 %v157, %v156
    %v181 = vpack.c.b16 %v159, %v158
    %v182 = vpack.c.b16 %v161, %v160
    %v183 = vpack.c.b16 %v163, %v162
    %v184 = vpack.c.b16 %v165, %v164
    %v185 = vpack.c.b16 %v167, %v166
    %v186 = vpack.c.b16 %v169, %v168
    %v187 = vpack.c.b16 %v171, %v170
    %204 = vmatprep.subr.bf16.mxu0 0
    %205 = vmatpush1.bf16.msra.mxu0 %v179
    %206 = vmatprep.subr.bf16.mxu0 0
    %207 = vmatpush1.bf16.msra.mxu0 %v178
    %208 = vmatprep.subr.bf16.mxu0 0
    %209 = vmatpush1.bf16.msra.mxu0 %v177
    %210 = vmatprep.subr.bf16.mxu0 0
    %211 = vmatpush1.bf16.msra.mxu0 %v176
    %212 = vmatprep.subr.bf16.mxu0 0
    %213 = vmatpush1.bf16.msra.mxu0 %v175
    %214 = vmatprep.subr.bf16.mxu0 0
    %215 = vmatpush1.bf16.msra.mxu0 %v174
    %216 = vmatprep.subr.bf16.mxu0 0
    %217 = vmatpush1.bf16.msra.mxu0 %v173
    %218 = vmatprep.subr.bf16.mxu0 0
    %219 = vmatpush1.bf16.msra.mxu0 %v172
    %220 = vmatprep.subr.bf16.mxu0 0
    %221 = vmatpush2.bf16.msra.mxu0 %v187
    %222 = vmatprep.subr.bf16.mxu0 0
    %223 = vmatpush2.bf16.msra.mxu0 %v186
    %224 = vmatprep.subr.bf16.mxu0 0
    %225 = vmatpush2.bf16.msra.mxu0 %v185
    %226 = vmatprep.subr.bf16.mxu0 0
    %227 = vmatpush2.bf16.msra.mxu0 %v184
    %228 = vmatprep.subr.bf16.mxu0 0
    %229 = vmatpush2.bf16.msra.mxu0 %v183
    %230 = vmatprep.subr.bf16.mxu0 0
    %231 = vmatpush2.bf16.msra.mxu0 %v182
    %232 = vmatprep.subr.bf16.mxu0 0
    %233 = vmatpush2.bf16.msra.mxu0 %v181
    %234 = vmatprep.subr.bf16.mxu0 0
    %235 = vmatpush2.bf16.msra.mxu0 %v180
    %236 = vmatprep.mubr.bf16.mxu0 %v105
    %237 = vmatmul.mubr.bf16.gmra.mxu0 %v98
    %v238 = vpop.f32.mrf.mxu0
    %v239 = vadd.f32 %v81, %v238
    %v240 = vpop.f32.mrf.mxu0
    %v241 = vpop.f32.mrf.mxu0
    %v242 = vpop.f32.mrf.mxu0
    %243 = vdwg.mxu0
    %v244 = vmax.f32 %v239, 0.0
    %v245 = vpack.c.bf16 %v244, %v244
    %v246 = vld [vmem:[%s3] sm:$0xf]
    %v247 = vld [vmem:[%s3 + $0x4] sm:$0xf]
    %v248 = vld [vmem:[%s3 + $0x8] sm:$0xf]
    %v249 = vld [vmem:[%s3 + $0xc] sm:$0xf]
    %v250 = vld [vmem:[%s4] sm:$0x1]
    %v252 = vlaneseq
    %v253 = vshrl.u32 %v252, 7
    %v254 = vsub.s32 0, %v253
    %v255 = vrot.slane %v250, %v254
    %v261 = vunpack.c.l.b16 %v246
    %v262 = vunpack.c.l.b16 %v247
    %v263 = vunpack.c.l.b16 %v248
    %v264 = vunpack.c.l.b16 %v249
    %v265 = vpack.c.b16 %v262, %v261
    %v266 = vpack.c.b16 %v264, %v263
    %vm269 = vcmask 261120
    %v271 = vsel %vm269, %v245, 0
    %273 = vmatprep.subr.bf16.mxu0 0
    %274 = vmatpush1.bf16.msra.mxu0 0
    %275 = vmatprep.subr.bf16.mxu0 0
    %276 = vmatpush1.bf16.msra.mxu0 0
    %277 = vmatprep.subr.bf16.mxu0 0
    %278 = vmatpush1.bf16.msra.mxu0 0
    %279 = vmatprep.subr.bf16.mxu0 0
    %280 = vmatpush1.bf16.msra.mxu0 0
    %281 = vmatprep.subr.bf16.mxu0 0
    %282 = vmatpush1.bf16.msra.mxu0 0
    %283 = vmatprep.subr.bf16.mxu0 0
    %284 = vmatpush1.bf16.msra.mxu0 0
    %285 = vmatprep.subr.bf16.mxu0 0
    %286 = vmatpush1.bf16.msra.mxu0 %v266
    %287 = vmatprep.subr.bf16.mxu0 0
    %288 = vmatpush1.bf16.msra.mxu0 %v265
    %289 = vmatprep.subr.bf16.mxu0 0
    %290 = vmatpush2.bf16.msra.mxu0 0
    %291 = vmatprep.subr.bf16.mxu0 0
    %292 = vmatpush2.bf16.msra.mxu0 0
    %293 = vmatprep.subr.bf16.mxu0 0
    %294 = vmatpush2.bf16.msra.mxu0 0
    %295 = vmatprep.subr.bf16.mxu0 0
    %296 = vmatpush2.bf16.msra.mxu0 0
    %297 = vmatprep.subr.bf16.mxu0 0
    %298 = vmatpush2.bf16.msra.mxu0 0
    %299 = vmatprep.subr.bf16.mxu0 0
    %300 = vmatpush2.bf16.msra.mxu0 0
    %301 = vmatprep.subr.bf16.mxu0 0
    %302 = vmatpush2.bf16.msra.mxu0 0
    %303 = vmatprep.subr.bf16.mxu0 0
    %304 = vmatpush2.bf16.msra.mxu0 0
    %305 = vmatprep.mubr.bf16.mxu0 0
    %306 = vmatmul.mubr.bf16.gmra.mxu0 %v271
    %v307 = vpop.f32.mrf.mxu0
    %v308 = vadd.f32 %v255, %v307
    %v309 = vpop.f32.mrf.mxu0
    %v310 = vpop.f32.mrf.mxu0
    %v311 = vpop.f32.mrf.mxu0
    %312 = vdwg.mxu0
    %v313 = vmax.f32 %v308, 0.0
    %v314 = vpack.c.bf16 %v313, %v313
    %v315 = vld [vmem:[%s5] sm:$0xf]
    %v316 = vld [vmem:[%s5 + $0x4] sm:$0xf]
    %v317 = vld [vmem:[%s5 + $0x8] sm:$0xf]
    %v318 = vld [vmem:[%s5 + $0xc] sm:$0xf]
    %v319 = vld [vmem:[%s6] sm:$0x1]
    %v321 = vlaneseq
    %v322 = vshrl.u32 %v321, 7
    %v323 = vsub.s32 0, %v322
    %v324 = vrot.slane %v319, %v323
    %v330 = vunpack.c.l.b16 %v315
    %v331 = vunpack.c.l.b16 %v316
    %v332 = vunpack.c.l.b16 %v317
    %v333 = vunpack.c.l.b16 %v318
    %v334 = vpack.c.b16 %v331, %v330
    %v335 = vpack.c.b16 %v333, %v332
    %v339 = vsel %vm269, %v314, 0
    %341 = vmatprep.subr.bf16.mxu0 0
    %342 = vmatpush1.bf16.msra.mxu0 0
    %343 = vmatprep.subr.bf16.mxu0 0
    %344 = vmatpush1.bf16.msra.mxu0 0
    %345 = vmatprep.subr.bf16.mxu0 0
    %346 = vmatpush1.bf16.msra.mxu0 0
    %347 = vmatprep.subr.bf16.mxu0 0
    %348 = vmatpush1.bf16.msra.mxu0 0
    %349 = vmatprep.subr.bf16.mxu0 0
    %350 = vmatpush1.bf16.msra.mxu0 0
    %351 = vmatprep.subr.bf16.mxu0 0
    %352 = vmatpush1.bf16.msra.mxu0 0
    %353 = vmatprep.subr.bf16.mxu0 0
    %354 = vmatpush1.bf16.msra.mxu0 %v335
    %355 = vmatprep.subr.bf16.mxu0 0
    %356 = vmatpush1.bf16.msra.mxu0 %v334
    %357 = vmatprep.subr.bf16.mxu0 0
    %358 = vmatpush2.bf16.msra.mxu0 0
    %359 = vmatprep.subr.bf16.mxu0 0
    %360 = vmatpush2.bf16.msra.mxu0 0
    %361 = vmatprep.subr.bf16.mxu0 0
    %362 = vmatpush2.bf16.msra.mxu0 0
    %363 = vmatprep.subr.bf16.mxu0 0
    %364 = vmatpush2.bf16.msra.mxu0 0
    %365 = vmatprep.subr.bf16.mxu0 0
    %366 = vmatpush2.bf16.msra.mxu0 0
    %367 = vmatprep.subr.bf16.mxu0 0
    %368 = vmatpush2.bf16.msra.mxu0 0
    %369 = vmatprep.subr.bf16.mxu0 0
    %370 = vmatpush2.bf16.msra.mxu0 0
    %371 = vmatprep.subr.bf16.mxu0 0
    %372 = vmatpush2.bf16.msra.mxu0 0
    %373 = vmatprep.mubr.bf16.mxu0 0
    %374 = vmatmul.mubr.bf16.gmra.mxu0 %v339
    %v375 = vpop.f32.mrf.mxu0
    %v376 = vadd.f32 %v324, %v375
    %v377 = vpop.f32.mrf.mxu0
    %v378 = vpop.f32.mrf.mxu0
    %v379 = vpop.f32.mrf.mxu0
    %380 = vdwg.mxu0
    %vm381 = vcmask 25600
    %v382 = vsel %vm381, %v376, 0.0
    %v383 = vrot.slane %v382, 4
    %v384 = vadd.f32 %v382, %v383
    %v385 = vrot.slane %v384, 2
    %v386 = vadd.f32 %v384, %v385
    %v387 = vrot.slane %v386, 1
    %v388 = vadd.f32 %v386, %v387
    %v389 = vrcp.pop 2.0
    %v390 = vmul.f32 %v388, %v389
    %vm391 = vcmask 24576
    %392 = vst.msk [vmem:[#allocation2] sm:$0x1] %vm391, %v390
    %v393 = vld [vmem:[%s7] sm:$0xf]
    %v394 = vld [vmem:[%s7 + $0x4] sm:$0xf]
    %v395 = vld [vmem:[%s7 + $0x8] sm:$0xf]
    %v396 = vld [vmem:[%s7 + $0xc] sm:$0xf]
    %v397 = vld [vmem:[%s8] sm:$0x1]
    %v399 = vlaneseq
    %v400 = vshrl.u32 %v399, 7
    %v401 = vsub.s32 0, %v400
    %v402 = vrot.slane %v397, %v401
    %405 = vrot.lane.b32.xlu0 %v245, 96
    %v406 = vpop.permute.xlu0 %405
    %v411 = vunpack.c.l.b16 %v393
    %v412 = vunpack.c.l.b16 %v394
    %v413 = vunpack.c.l.b16 %v395
    %v414 = vunpack.c.l.b16 %v396
    %v415 = vpack.c.b16 %v412, %v411
    %v416 = vpack.c.b16 %v414, %v413
    %v420 = vsel %vm269, %v406, 0
    %422 = vmatprep.subr.bf16.mxu0 0
    %423 = vmatpush1.bf16.msra.mxu0 0
    %424 = vmatprep.subr.bf16.mxu0 0
    %425 = vmatpush1.bf16.msra.mxu0 0
    %426 = vmatprep.subr.bf16.mxu0 0
    %427 = vmatpush1.bf16.msra.mxu0 0
    %428 = vmatprep.subr.bf16.mxu0 0
    %429 = vmatpush1.bf16.msra.mxu0 0
    %430 = vmatprep.subr.bf16.mxu0 0
    %431 = vmatpush1.bf16.msra.mxu0 0
    %432 = vmatprep.subr.bf16.mxu0 0
    %433 = vmatpush1.bf16.msra.mxu0 0
    %434 = vmatprep.subr.bf16.mxu0 0
    %435 = vmatpush1.bf16.msra.mxu0 %v416
    %436 = vmatprep.subr.bf16.mxu0 0
    %437 = vmatpush1.bf16.msra.mxu0 %v415
    %438 = vmatprep.subr.bf16.mxu0 0
    %439 = vmatpush2.bf16.msra.mxu0 0
    %440 = vmatprep.subr.bf16.mxu0 0
    %441 = vmatpush2.bf16.msra.mxu0 0
    %442 = vmatprep.subr.bf16.mxu0 0
    %443 = vmatpush2.bf16.msra.mxu0 0
    %444 = vmatprep.subr.bf16.mxu0 0
    %445 = vmatpush2.bf16.msra.mxu0 0
    %446 = vmatprep.subr.bf16.mxu0 0
    %447 = vmatpush2.bf16.msra.mxu0 0
    %448 = vmatprep.subr.bf16.mxu0 0
    %449 = vmatpush2.bf16.msra.mxu0 0
    %450 = vmatprep.subr.bf16.mxu0 0
    %451 = vmatpush2.bf16.msra.mxu0 0
    %452 = vmatprep.subr.bf16.mxu0 0
    %453 = vmatpush2.bf16.msra.mxu0 0
    %454 = vmatprep.mubr.bf16.mxu0 0
    %455 = vmatmul.mubr.bf16.gmra.mxu0 %v420
    %v456 = vpop.f32.mrf.mxu0
    %v457 = vadd.f32 %v402, %v456
    %v458 = vpop.f32.mrf.mxu0
    %v459 = vpop.f32.mrf.mxu0
    %v460 = vpop.f32.mrf.mxu0
    %461 = vdwg.mxu0
    %v462 = vmax.f32 %v457, 0.0
    %v463 = vpack.c.bf16 %v462, %v462
    %v464 = vld [vmem:[%s9] sm:$0xf]
    %v465 = vld [vmem:[%s9 + $0x4] sm:$0xf]
    %v466 = vld [vmem:[%s9 + $0x8] sm:$0xf]
    %v467 = vld [vmem:[%s9 + $0xc] sm:$0xf]
    %v468 = vld [vmem:[%s10] sm:$0x1]
    %v470 = vlaneseq
    %v471 = vshrl.u32 %v470, 7
    %v472 = vsub.s32 0, %v471
    %v473 = vrot.slane %v468, %v472
    %v479 = vunpack.c.l.b16 %v464
    %v480 = vunpack.c.l.b16 %v465
    %v481 = vunpack.c.l.b16 %v466
    %v482 = vunpack.c.l.b16 %v467
    %v483 = vpack.c.b16 %v480, %v479
    %v484 = vpack.c.b16 %v482, %v481
    %v488 = vsel %vm269, %v463, 0
    %490 = vmatprep.subr.bf16.mxu0 0
    %491 = vmatpush1.bf16.msra.mxu0 0
    %492 = vmatprep.subr.bf16.mxu0 0
    %493 = vmatpush1.bf16.msra.mxu0 0
    %494 = vmatprep.subr.bf16.mxu0 0
    %495 = vmatpush1.bf16.msra.mxu0 0
    %496 = vmatprep.subr.bf16.mxu0 0
    %497 = vmatpush1.bf16.msra.mxu0 0
    %498 = vmatprep.subr.bf16.mxu0 0
    %499 = vmatpush1.bf16.msra.mxu0 0
    %500 = vmatprep.subr.bf16.mxu0 0
    %501 = vmatpush1.bf16.msra.mxu0 0
    %502 = vmatprep.subr.bf16.mxu0 0
    %503 = vmatpush1.bf16.msra.mxu0 %v484
    %504 = vmatprep.subr.bf16.mxu0 0
    %505 = vmatpush1.bf16.msra.mxu0 %v483
    %506 = vmatprep.subr.bf16.mxu0 0
    %507 = vmatpush2.bf16.msra.mxu0 0
    %508 = vmatprep.subr.bf16.mxu0 0
    %509 = vmatpush2.bf16.msra.mxu0 0
    %510 = vmatprep.subr.bf16.mxu0 0
    %511 = vmatpush2.bf16.msra.mxu0 0
    %512 = vmatprep.subr.bf16.mxu0 0
    %513 = vmatpush2.bf16.msra.mxu0 0
    %514 = vmatprep.subr.bf16.mxu0 0
    %515 = vmatpush2.bf16.msra.mxu0 0
    %516 = vmatprep.subr.bf16.mxu0 0
    %517 = vmatpush2.bf16.msra.mxu0 0
    %518 = vmatprep.subr.bf16.mxu0 0
    %519 = vmatpush2.bf16.msra.mxu0 0
    %520 = vmatprep.subr.bf16.mxu0 0
    %521 = vmatpush2.bf16.msra.mxu0 0
    %522 = vmatprep.mubr.bf16.mxu0 0
    %523 = vmatmul.mubr.bf16.gmra.mxu0 %v488
    %v524 = vpop.f32.mrf.mxu0
    %v525 = vadd.f32 %v473, %v524
    %v526 = vpop.f32.mrf.mxu0
    %v527 = vpop.f32.mrf.mxu0
    %v528 = vpop.f32.mrf.mxu0
    %529 = vdwg.mxu0
    %v530 = vsel %vm381, %v525, 0.0
    %v531 = vrot.slane %v530, 4
    %v532 = vadd.f32 %v530, %v531
    %v533 = vrot.slane %v532, 2
    %v534 = vadd.f32 %v532, %v533
    %v535 = vrot.slane %v534, 1
    %v536 = vadd.f32 %v534, %v535
    %v537 = vmul.f32 %v536, %v389
    %538 = vst.msk [vmem:[#allocation4] sm:$0x1] %vm391, %v537
    // Predicated region
    $region46: #{tpu_custom_call.1} parent=1 // pred_check
      _
    $region47: #{tpu_custom_call.1} parent=1 // pred_check_branch
      %540 = sbr.rel (0) target = $region49
    $region48: #{tpu_custom_call.1} parent=1 // pred_region
      %s542 = ssub.s32 16, 16
      %543 = vsyncadd [#allocation3], %s542
      %s545 = sshll.u32 [#allocation2], 4
      %s546 = int_to_ptr.vmem [resolvable:$true] %s545
      %548 = dma.vmem_to_hbm [thread:$0]  %s546, 16, %s11, [#allocation3]
    $region49: #{tpu_custom_call.1} parent=1 // pred_fallthru
      _
    // Predicated region
    $region50: #{tpu_custom_call.1} parent=1 // pred_check
      _
    $region51: #{tpu_custom_call.1} parent=1 // pred_check_branch
      %550 = sbr.rel (0) target = $region53
    $region52: #{tpu_custom_call.1} parent=1 // pred_region
      %s552 = ssub.s32 16, 16
      %553 = vsyncadd [#allocation5], %s552
      %s555 = sshll.u32 [#allocation4], 4
      %s556 = int_to_ptr.vmem [resolvable:$true] %s555
      %558 = dma.vmem_to_hbm [thread:$0]  %s556, 16, %s12, [#allocation5]
    $region53: #{tpu_custom_call.1} parent=1 // pred_fallthru
      _
    // Predicated region
    $region54: #{tpu_custom_call.1} parent=1 // pred_check
      _
    $region55: #{tpu_custom_call.1} parent=1 // pred_check_branch
      %560 = sbr.rel (0) target = $region57
    $region56: #{tpu_custom_call.1} parent=1 // pred_region
      %561 = dma.done [#allocation3], 16
    $region57: #{tpu_custom_call.1} parent=1 // pred_fallthru
      _
    // Predicated region
    $region58: #{tpu_custom_call.1} parent=1 // pred_check
      _
    $region59: #{tpu_custom_call.1} parent=1 // pred_check_branch
      %563 = sbr.rel (0) target = $region61
    $region60: #{tpu_custom_call.1} parent=1 // pred_region
      %564 = dma.done [#allocation5], 16
    $region61: #{tpu_custom_call.1} parent=1 // pred_fallthru
      _
    %565 = vsyncpa [#allocation3], 1
    %566 = vsyncpa [#allocation5], 1

</llo_original>
